<compile_context>
chip_gen: v7x
topology: tpu7x:2x2x1
jax: 0.10.0
libtpu: 0.0.40
codegen_flags: <defaults>
</compile_context>

<pallas_src>
import functools

import jax
import jax.numpy as jnp
from jax import lax
from jax.experimental import pallas as pl
from jax.experimental.pallas import tpu as pltpu

_LANES = 128
_ACC_SUBLANES = 8          # f32 accumulator height = one sublane group


def _cdiv(a, b):
    return -(-a // b)


def _round_up(x, m):
    return _cdiv(x, m) * m


def _sublane_multiple(dtype) -> int:
    # Packed-sublane multiple per dtype: 8 (4-byte), 16 (2-byte), 32 (1-byte).
    return {4: 8, 2: 16, 1: 32}.get(jnp.dtype(dtype).itemsize, 8)


def _default_num_parallel() -> int:
    """Best-effort TensorCore count per device (2 on v7x / megacore chips)."""
    try:
        d = jax.devices()[0]
        n = getattr(d, "num_cores", None) or getattr(d, "core_count", None)
        if isinstance(n, int) and n >= 1:
            return min(2, n)
        kind = str(getattr(d, "device_kind", "")).lower()
        # Single-TensorCore chips: keep the outer axis trivially sized.
        if any(t in kind for t in
               ("v5e", "v5 lite", "v5lite", "v6e", "v6 lite", "v6lite")):
            return 1
    except Exception:
        pass
    return 2  # unknown -> keep the parallel axis alive (v7x / megacore)


def _bce_logits_kernel(pred_ref, targ_ref, out_ref, acc_ref, *, tile_rows,
                       valid_rows, needs_mask):
    p = pl.program_id(0)                      # "parallel" axis (megacore split)
    j = pl.program_id(1)                      # "arbitrary" reduction axis

    @pl.when(j == 0)
    def _():
        acc_ref[...] = jnp.zeros_like(acc_ref)

    x = pred_ref[...].astype(jnp.float32)
    y = targ_ref[...].astype(jnp.float32)

    # Numerically stable BCE with logits (matches torch's formulation):
    #   l = max(x, 0) - x*y + log(1 + exp(-|x|))
    per_elem = jnp.maximum(x, 0.0) - x * y + jnp.log1p(jnp.exp(-jnp.abs(x)))

    if needs_mask:
        # Rows beyond the logical array end (ragged last block / spare
        # parallel coverage) contain unspecified data; zero their contribution.
        row0 = (p * pl.num_programs(1) + j) * tile_rows
        row_ids = row0 + lax.broadcasted_iota(jnp.int32, per_elem.shape, 0)
        per_elem = jnp.where(row_ids < valid_rows, per_elem, 0.0)

    # Partial tree-reduce into a single-sublane-group (8, C) accumulator.
    # The reshape only splits the sublane axis on (8, 128) tile boundaries
    # (free); the sum over the leading axis is pure VPU vreg adds.
    cols = per_elem.shape[-1]
    groups = tile_rows // _ACC_SUBLANES
    acc_ref[...] += per_elem.reshape(groups, _ACC_SUBLANES, cols).sum(axis=0)

    @pl.when(j == pl.num_programs(1) - 1)
    def _():
        out_ref[...] = acc_ref[...]


def logit_binary_cross_entropy(pred_score, target_score):
    """Equivalent of LogitBinaryCrossEntropy().forward(pred, target)."""
    assert pred_score.shape == target_score.shape
    assert pred_score.ndim == 2
    B, C = pred_score.shape
    n_elems = B * C
    dtype = pred_score.dtype
    itemsize = jnp.dtype(dtype).itemsize
    sub = _sublane_multiple(dtype)

    # Rough per-row VMEM cost: 2 inputs x 2 pipeline buffers (input dtype) plus
    # ~5 block-sized f32 temporaries for the elementwise chain.
    budget = 36 * 1024 * 1024

    def per_row_bytes(lane_cols):
        return lane_cols * (4 * itemsize + 5 * 4)

    c_lanes_native = _round_up(C, _LANES)
    use_native = (C >= _LANES) and (sub * per_row_bytes(c_lanes_native) <= budget)

    if use_native:
        # Native path: no pad, no reshape, no extra HBM pass.
        pred2d, targ2d = pred_score, target_score
        rows, cols, lane_cols = B, C, c_lanes_native
    else:
        # Lane-dense fallback for narrow C (or pathologically wide C): flatten
        # to (rows, 128). Pad only to the next multiple of 128 (< 128 values);
        # pred=-1e4 / target=0 contribute exactly 0 (exp underflows to 0).
        rows = _cdiv(n_elems, _LANES)
        padded = rows * _LANES
        pred_flat = pred_score.reshape(-1)
        targ_flat = target_score.reshape(-1)
        if padded != n_elems:
            pad = padded - n_elems
            pred_flat = jnp.pad(pred_flat, (0, pad), constant_values=-1e4)
            targ_flat = jnp.pad(targ_flat, (0, pad), constant_values=0)
        pred2d = pred_flat.reshape(rows, _LANES)
        targ2d = targ_flat.reshape(rows, _LANES)
        cols, lane_cols = _LANES, _LANES

    # ---- tiling --------------------------------------------------------------
    num_parallel = _default_num_parallel()
    if rows < num_parallel * sub:
        num_parallel = 1          # too small to give each core a sublane group

    target_elems = 1 << 20        # ~1M elements per input block
    tile_rows = max(sub, (target_elems // lane_cols) // sub * sub)
    tile_rows = min(tile_rows,
                    max(sub, (budget // per_row_bytes(lane_cols)) // sub * sub))
    # Shrink so both TensorCores keep ~half the rows (keeps the v7x megacore
    # split alive for mid-sized inputs instead of dropping to one core).
    tile_rows = min(tile_rows, _round_up(_cdiv(rows, num_parallel), sub))

    inner = _cdiv(rows, num_parallel * tile_rows)
    needs_mask = (num_parallel * inner * tile_rows != rows)

    # ---- VMEM budget -----------------------------------------------------------
    block_bytes = tile_rows * lane_cols * itemsize
    tmp_bytes = 5 * tile_rows * lane_cols * 4
    acc_bytes = _ACC_SUBLANES * lane_cols * 4
    vmem_needed = 2 * 2 * block_bytes + tmp_bytes + 2 * acc_bytes + (1 << 20)
    # Base the limit on actual need (+floor at the v5e default), cap well under
    # v7x's 64 MiB physical VMEM.
    vmem_limit = int(min(max(vmem_needed, 16 << 20), 48 << 20))

    kernel = functools.partial(_bce_logits_kernel, tile_rows=tile_rows,
                               valid_rows=rows, needs_mask=needs_mask)

    cost = pl.CostEstimate(
        flops=5 * rows * cols,
        transcendentals=2 * rows * cols,
        bytes_accessed=2 * rows * cols * itemsize
                       + num_parallel * _ACC_SUBLANES * cols * 4,
    )

    in_idx = lambda p, j: (p * inner + j, 0)

    partials = pl.pallas_call(
        kernel,
        out_shape=jax.ShapeDtypeStruct((num_parallel * _ACC_SUBLANES, cols),
                                       jnp.float32),
        grid_spec=pltpu.PrefetchScalarGridSpec(
            num_scalar_prefetch=0,
            grid=(num_parallel, inner),
            in_specs=[
                pl.BlockSpec((tile_rows, cols), in_idx),
                pl.BlockSpec((tile_rows, cols), in_idx),
            ],
            out_specs=pl.BlockSpec((_ACC_SUBLANES, cols), lambda p, j: (p, 0)),
            scratch_shapes=[pltpu.VMEM((_ACC_SUBLANES, cols), jnp.float32)],
        ),
        compiler_params=pltpu.CompilerParams(
            dimension_semantics=("parallel", "arbitrary"),
            vmem_limit_bytes=vmem_limit,
        ),
        cost_estimate=cost,
    )(pred2d, targ2d)

    # Tiny final reduce + scale in the wrapper (keeps the kernel output
    # per-core-independent so megacore can split the outer axis).
    total = jnp.sum(partials, dtype=jnp.float32)
    mean_loss = total / jnp.float32(n_elems)
    return mean_loss * jnp.float32(C)


def _reference(pred, target):
    x = pred.astype(jnp.float32)
    y = target.astype(jnp.float32)
    per_elem = jnp.maximum(x, 0.0) - x * y + jnp.log1p(jnp.exp(-jnp.abs(x)))
    return jnp.mean(per_elem) * pred.shape[1]


if __name__ == "__main__":
    key = jax.random.PRNGKey(0)
    k1, k2, k3, k4, k5, k6 = jax.random.split(key, 6)

    # Small VQA-style shape (C < 128 -> lane-dense flattened path, no pad).
    B, C = 16, 32
    pred_score = jax.random.normal(k1, (B, C), dtype=jnp.float32) * 2.0
    target_score = jax.random.uniform(k2, (B, C), dtype=jnp.float32)
    loss = jax.block_until_ready(logit_binary_cross_entropy(pred_score, target_score))
    ref = _reference(pred_score, target_score)
    assert jnp.allclose(loss, ref, rtol=1e-5, atol=1e-5), (loss, ref)

    # Ragged shape (flattened path with a <128-element tail pad + row masking).
    B2, C2 = 10, 7
    pred2 = jax.random.normal(k3, (B2, C2), dtype=jnp.float32) * 3.0
    targ2 = jax.random.uniform(k4, (B2, C2), dtype=jnp.float32)
    loss2 = jax.block_until_ready(logit_binary_cross_entropy(pred2, targ2))
    ref2 = _reference(pred2, targ2)
    assert jnp.allclose(loss2, ref2, rtol=1e-5, atol=1e-5), (loss2, ref2)

    # Wide-C shape (C >= 128 -> native (B, C) path: no pad/reshape HBM pass,
    # ragged batch handled by the in-kernel row mask).
    B3, C3 = 20, 200
    pred3 = jax.random.normal(k5, (B3, C3), dtype=jnp.float32)
    targ3 = jax.random.uniform(k6, (B3, C3), dtype=jnp.float32)
    loss3 = jax.block_until_ready(logit_binary_cross_entropy(pred3, targ3))
    ref3 = _reference(pred3, targ3)
    assert jnp.allclose(loss3, ref3, rtol=1e-5, atol=1e-5), (loss3, ref3)

    print("KERNEL_OK")
</pallas_src>

<mosaic_0001>
module attributes {stable_mosaic.version = 11 : i64} {
  func.func @_bce_logits_kernel(%arg0: i32, %arg1: i32, %arg2: memref<8x128xf32, #tpu.memory_space<vmem>>, %arg3: memref<8x128xf32, #tpu.memory_space<vmem>>, %arg4: memref<8x128xf32, #tpu.memory_space<vmem>>, %arg5: memref<8x128xf32, #tpu.memory_space<vmem>>) attributes {dimension_semantics = [#tpu.dimension_semantics<parallel>, #tpu.dimension_semantics<arbitrary>], iteration_bounds = array<i64: 1, 1>, scalar_prefetch = 0 : i64, scratch_operands = 1 : i64, tpu.core_type = #tpu.core_type<tc>, window_params = [{transform_indices = @transform_0, window_bounds = array<i64: 8, 128>}, {transform_indices = @transform_1, window_bounds = array<i64: 8, 128>}, {transform_indices = @transform_2, window_bounds = array<i64: 8, 128>}]} {
    %c0_i32 = arith.constant 0 : i32
    %0 = arith.cmpi eq, %arg1, %c0_i32 : i32
    %1 = arith.extui %0 : i1 to i32
    %c0_i32_0 = arith.constant 0 : i32
    %2 = arith.cmpi ne, %1, %c0_i32_0 : i32
    scf.if %2 {
      %cst_13 = arith.constant 0.000000e+00 : f32
      %33 = vector.broadcast %cst_13 : f32 to vector<8x128xf32>
      %c0_14 = arith.constant 0 : index
      %c0_15 = arith.constant 0 : index
      %34 = vector.load %arg5[%c0_14, %c0_15] : memref<8x128xf32, #tpu.memory_space<vmem>>, vector<8x128xf32>
      tpu.vector_store %arg5[%c0_14, %c0_15], %33 {strides = array<i32>} : memref<8x128xf32, #tpu.memory_space<vmem>>, vector<8x128xf32>,
    } else {
    }
    %c0 = arith.constant 0 : index
    %c0_1 = arith.constant 0 : index
    %3 = vector.load %arg2[%c0, %c0_1] : memref<8x128xf32, #tpu.memory_space<vmem>>, vector<8x128xf32>
    %c0_2 = arith.constant 0 : index
    %c0_3 = arith.constant 0 : index
    %4 = vector.load %arg3[%c0_2, %c0_3] : memref<8x128xf32, #tpu.memory_space<vmem>>, vector<8x128xf32>
    %cst = arith.constant 0.000000e+00 : f32
    %5 = vector.broadcast %cst : f32 to vector<8x128xf32>
    %6 = arith.maximumf %3, %5 : vector<8x128xf32>
    %7 = arith.mulf %3, %4 : vector<8x128xf32>
    %8 = arith.subf %6, %7 : vector<8x128xf32>
    %9 = math.absf %3 : vector<8x128xf32>
    %cst_4 = arith.constant 0.000000e+00 : f32
    %10 = vector.broadcast %cst_4 : f32 to vector<8x128xf32>
    %11 = arith.subf %10, %9 : vector<8x128xf32>
    %12 = math.exp %11 : vector<8x128xf32>
    %13 = math.log1p %12 : vector<8x128xf32>
    %14 = arith.addf %8, %13 : vector<8x128xf32>
    %c1_i32 = arith.constant 1 : i32
    %15 = arith.muli %arg0, %c1_i32 : i32
    %16 = arith.addi %15, %arg1 : i32
    %c8_i32 = arith.constant 8 : i32
    %17 = arith.muli %16, %c8_i32 : i32
    %18 = tpu.iota {dimensions = array<i32: 0>} : vector<8x128xi32>
    %19 = vector.broadcast %17 : i32 to vector<8x128xi32>
    %20 = arith.addi %19, %18 : vector<8x128xi32>
    %c4_i32 = arith.constant 4 : i32
    %21 = vector.broadcast %c4_i32 : i32 to vector<8x128xi32>
    %22 = arith.cmpi slt, %20, %21 : vector<8x128xi32>
    %cst_5 = arith.constant 0.000000e+00 : f32
    %23 = vector.broadcast %cst_5 : f32 to vector<8x128xf32>
    %24 = arith.select %22, %14, %23 : vector<8x128xi1>, vector<8x128xf32>
    %c0_6 = arith.constant 0 : index
    %c0_7 = arith.constant 0 : index
    %25 = vector.load %arg5[%c0_6, %c0_7] : memref<8x128xf32, #tpu.memory_space<vmem>>, vector<8x128xf32>
    %26 = vector.shape_cast %24 : vector<8x128xf32> to vector<1x8x128xf32>
    %cst_8 = arith.constant dense<0.000000e+00> : vector<8x128xf32>
    %27 = vector.multi_reduction <add>, %26, %cst_8 [0] : vector<1x8x128xf32> to vector<8x128xf32>
    %28 = arith.addf %25, %27 : vector<8x128xf32>
    %c0_9 = arith.constant 0 : index
    %c0_10 = arith.constant 0 : index
    %29 = vector.load %arg5[%c0_9, %c0_10] : memref<8x128xf32, #tpu.memory_space<vmem>>, vector<8x128xf32>
    tpu.vector_store %arg5[%c0_9, %c0_10], %28 {strides = array<i32>} : memref<8x128xf32, #tpu.memory_space<vmem>>, vector<8x128xf32>,
    %c0_i32_11 = arith.constant 0 : i32
    %30 = arith.cmpi eq, %arg1, %c0_i32_11 : i32
    %31 = arith.extui %30 : i1 to i32
    %c0_i32_12 = arith.constant 0 : i32
    %32 = arith.cmpi ne, %31, %c0_i32_12 : i32
    scf.if %32 {
      %c0_13 = arith.constant 0 : index
      %c0_14 = arith.constant 0 : index
      %33 = vector.load %arg5[%c0_13, %c0_14] : memref<8x128xf32, #tpu.memory_space<vmem>>, vector<8x128xf32>
      %c0_15 = arith.constant 0 : index
      %c0_16 = arith.constant 0 : index
      %34 = vector.load %arg4[%c0_15, %c0_16] : memref<8x128xf32, #tpu.memory_space<vmem>>, vector<8x128xf32>
      tpu.vector_store %arg4[%c0_15, %c0_16], %33 {strides = array<i32>} : memref<8x128xf32, #tpu.memory_space<vmem>>, vector<8x128xf32>,
    } else {
    }
    return
  }
  func.func @transform_0(%arg0: i32, %arg1: i32) -> (i32, i32) {
    %c1_i32 = arith.constant 1 : i32
    %0 = arith.muli %arg0, %c1_i32 : i32
    %1 = arith.addi %0, %arg1 : i32
    %c0_i32 = arith.constant 0 : i32
    %c0_i32_0 = arith.constant 0 : i32
    return %1, %c0_i32 : i32, i32
  }
  func.func @transform_1(%arg0: i32, %arg1: i32) -> (i32, i32) {
    %c1_i32 = arith.constant 1 : i32
    %0 = arith.muli %arg0, %c1_i32 : i32
    %1 = arith.addi %0, %arg1 : i32
    %c0_i32 = arith.constant 0 : i32
    %c0_i32_0 = arith.constant 0 : i32
    return %1, %c0_i32 : i32, i32
  }
  func.func @transform_2(%arg0: i32, %arg1: i32) -> (i32, i32) {
    %c0_i32 = arith.constant 0 : i32
    %c0_i32_0 = arith.constant 0 : i32
    return %arg0, %c0_i32 : i32, i32
  }
}

</mosaic_0001>

<llo_original>
// kernel: tpu_custom_call.1
$region0: #{tpu_custom_call.1}
  #allocation0 [shape = 'u32[]', space=smem, size = 0x4, offset = 0x4, fixed_abs, tag = 'smem constant byte address 0x4 - core index']
  #allocation1 [shape = 'u32[144,128]{1,0:T(1,128)}', space=vmem, size = 0x12000, scoped, tag = 'internal scratch']
  #allocation2 [shape = 'f32[8,128]{1,0:T(8,128)}', space=vmem, size = 0x1000, scoped, tag = 'scratch operand']
  %s0 = inlined_call_operand.hbm [shape: f32[4,128], index: 0, kind: input, shape index: {}]
  %s1 = inlined_call_operand.hbm [shape: f32[4,128], index: 1, kind: input, shape index: {}]
  %s2 = inlined_call_operand.hbm [shape: f32[8,128], index: 2, kind: output, shape index: {}]
  %s3 = sld [smem:[#allocation0]]
  $region34: #{tpu_custom_call.1} parent=0
    _
  %s5 = ssub.s32 1, %s3
  %s6 = scalar_select 0, %s5, %s3
  $region1: #{tpu_custom_call.1} parent=0
    #allocation3 [shape = 'u8[4096]{0}', space=vmem, size = 0x1000, scoped, tag = 'input window, operand 0, single buffered']
    #allocation4 [shape = 's32[1]{0}', space=sflag, size = 0x4, scoped, tag = 'scoped memory for tpu_custom_call.1']
    #allocation5 [shape = 's32[1]{0}', space=sflag, size = 0x4, scoped, tag = 'scoped memory for tpu_custom_call.1']
    #allocation6 [shape = 'u8[4096]{0}', space=vmem, size = 0x1000, scoped, tag = 'input window, operand 1, single buffered']
    #allocation7 [shape = 's32[1]{0}', space=sflag, size = 0x4, scoped, tag = 'scoped memory for tpu_custom_call.1']
    #allocation8 [shape = 'u8[4096]{0}', space=vmem, size = 0x1000, scoped, tag = 'output window, operand 0, single buffered']
    %7 = vsyncpa [#allocation4], 0
    %8 = vsyncpa [#allocation7], 0
    %9 = vsyncpa [#allocation5], 0
    // Predicated region
    $region2: #{tpu_custom_call.1} parent=1 // pred_check
      _
    $region3: #{tpu_custom_call.1} parent=1 // pred_check_branch
      %11 = sbr.rel (0) target = $region5
    $region4: #{tpu_custom_call.1} parent=1 // pred_region
      %s12 = sadd.s32 0, 0
      %s13 = smul.u32 2, %s12
      %s14 = ssub.s32 1, %s13
      %s15 = smul.u32 64, %s14
      %s17 = ssub.s32 128, %s15
      %18 = vsyncadd [#allocation4], %s17
      %p19 = scmp.ne.s32.totalorder 0, %s15
      %s20 = smul.addr %s13, 64
      %s21 = scalar_lea.hbm %s0, %s20
      %s22 = smul.u32 4, %s14
      %s23 = sshll.u32 [#allocation3], 4
      %s24 = int_to_ptr.vmem [resolvable:$true] %s23
      %s25 = sshll.u32 %s22, 4
      %29 = dma.hbm_to_vmem [thread:$0]  (%p19), %s21, %s25, %s24, [#allocation4], 64, 64, 4
    $region5: #{tpu_custom_call.1} parent=1 // pred_fallthru
      _
    // Predicated region
    $region6: #{tpu_custom_call.1} parent=1 // pred_check
      _
    $region7: #{tpu_custom_call.1} parent=1 // pred_check_branch
      %31 = sbr.rel (0) target = $region9
    $region8: #{tpu_custom_call.1} parent=1 // pred_region
      %s32 = sadd.s32 0, 0
      %s33 = smul.u32 2, %s32
      %s34 = ssub.s32 1, %s33
      %s35 = smul.u32 64, %s34
      %s37 = ssub.s32 128, %s35
      %38 = vsyncadd [#allocation7], %s37
      %p39 = scmp.ne.s32.totalorder 0, %s35
      %s40 = smul.addr %s33, 64
      %s41 = scalar_lea.hbm %s1, %s40
      %s42 = smul.u32 4, %s34
      %s43 = sshll.u32 [#allocation6], 4
      %s44 = int_to_ptr.vmem [resolvable:$true] %s43
      %s45 = sshll.u32 %s42, 4
      %49 = dma.hbm_to_vmem [thread:$0]  (%p39), %s41, %s45, %s44, [#allocation7], 64, 64, 4
    $region9: #{tpu_custom_call.1} parent=1 // pred_fallthru
      _
    // Predicated region
    $region10: #{tpu_custom_call.1} parent=1 // pred_check
      _
    $region11: #{tpu_custom_call.1} parent=1 // pred_check_branch
      %51 = sbr.rel (0) target = $region13
    $region12: #{tpu_custom_call.1} parent=1 // pred_region
      %52 = dma.done [#allocation4], 128
    $region13: #{tpu_custom_call.1} parent=1 // pred_fallthru
      _
    // Predicated region
    $region14: #{tpu_custom_call.1} parent=1 // pred_check
      _
    $region15: #{tpu_custom_call.1} parent=1 // pred_check_branch
      %54 = sbr.rel (0) target = $region17
    $region16: #{tpu_custom_call.1} parent=1 // pred_region
      %55 = dma.done [#allocation7], 128
    $region17: #{tpu_custom_call.1} parent=1 // pred_fallthru
      _
    %s56 = sadd.s32 0, 0
    %s57 = smul.u32 2, %s56
    %s58 = ssub.s32 1, %s57
    %s59 = smul.u32 64, %s58
    %s60 = sadd.s32 0, 0
    %s61 = smul.u32 2, %s60
    %s62 = ssub.s32 1, %s61
    %s63 = smul.u32 64, %s62
    %p64 = scmp.eq.s32.totalorder 0, 0
    // Predicated region
    $region18: #{tpu_custom_call.1} parent=1 // pred_check
      %p65 = pneg %p64
    $region19: #{tpu_custom_call.1} parent=1 // pred_check_branch
      %67 = sbr.rel (%p65) target = $region21
    $region20: #{tpu_custom_call.1} parent=1 // pred_region
      %68 = vst [vmem:[#allocation2] sm:$0xff] 0.0
    $region21: #{tpu_custom_call.1} parent=1 // pred_fallthru
      _
    %v69 = vld [vmem:[#allocation3] sm:$0xff]
    %v70 = vld [vmem:[#allocation6] sm:$0xff]
    %v71 = vmax.f32 %v69, 0.0
    %v72 = vmul.f32 %v69, %v70
    %v73 = vsub.f32 %v71, %v72
    %v74 = vand.u32 2147483647, %v69
    %v75 = vsub.f32 0.0, %v74
    %v76 = vmul.f32 %v75, 1.442695
    %v77 = vpow.pop %v76
    %v78 = vadd.f32 %v77, 1.0
    %v79 = vlog2.pop %v78
    %v80 = vmul.f32 %v79, 0.6931472
    %v81 = vmul.f32 -0.5, %v77
    %v82 = vadd.f32 %v81, 1.0
    %v83 = vmul.f32 %v82, %v77
    %v84 = vand.u32 2147483647, %v77
    %vm85 = vcmp.lt.f32.partialorder %v84, 0.0004427343
    %v86 = vsel %vm85, %v83, %v80
    %v87 = vadd.f32 %v73, %v86
    %s88 = sadd.s32 0, 0
    %s89 = smul.u32 %s88, 8
    %v90 = vlaneseq
    %v91 = vshrl.u32 %v90, 7
    %v92 = vstv %s89
    %v93 = vadd.s32 %v92, %v91
    %vm94 = vcmp.lt.s32.totalorder %v93, 4
    %v95 = vsel %vm94, %v87, 0.0
    %v96 = vld [vmem:[#allocation2] sm:$0xff]
    %v97 = vadd.f32 %v95, 0.0
    %v98 = vadd.f32 %v96, %v97
    %99 = vst [vmem:[#allocation2] sm:$0xff] %v98
    // Predicated region
    $region22: #{tpu_custom_call.1} parent=1 // pred_check
      %p100 = pneg %p64
    $region23: #{tpu_custom_call.1} parent=1 // pred_check_branch
      %102 = sbr.rel (%p100) target = $region25
    $region24: #{tpu_custom_call.1} parent=1 // pred_region
      %v103 = vld [vmem:[#allocation2] sm:$0xff]
      %104 = vst [vmem:[#allocation8] sm:$0xff] %v103
    $region25: #{tpu_custom_call.1} parent=1 // pred_fallthru
      _
    // Predicated region
    $region26: #{tpu_custom_call.1} parent=1 // pred_check
      _
    $region27: #{tpu_custom_call.1} parent=1 // pred_check_branch
      %106 = sbr.rel (0) target = $region29
    $region28: #{tpu_custom_call.1} parent=1 // pred_region
      %s108 = ssub.s32 128, 128
      %109 = vsyncadd [#allocation5], %s108
      %s111 = sshll.u32 [#allocation8], 4
      %s112 = int_to_ptr.vmem [resolvable:$true] %s111
      %114 = dma.vmem_to_hbm [thread:$0]  %s112, 128, %s2, [#allocation5]
    $region29: #{tpu_custom_call.1} parent=1 // pred_fallthru
      _
    // Predicated region
    $region30: #{tpu_custom_call.1} parent=1 // pred_check
      _
    $region31: #{tpu_custom_call.1} parent=1 // pred_check_branch
      %116 = sbr.rel (0) target = $region33
    $region32: #{tpu_custom_call.1} parent=1 // pred_region
      %117 = dma.done [#allocation5], 128
    $region33: #{tpu_custom_call.1} parent=1 // pred_fallthru
      _
    %118 = vsyncpa [#allocation4], 1
    %119 = vsyncpa [#allocation7], 1
    %120 = vsyncpa [#allocation5], 1

</llo_original>
